<compile_context>
chip_gen: v7x
topology: tpu7x:2x2x1
jax: 0.10.0
libtpu: 0.0.40
codegen_flags: <defaults>
</compile_context>

<pallas_src>
import math
import functools

import numpy as np
import jax
import jax.numpy as jnp
from jax.experimental import pallas as pl
from jax.experimental.pallas import tpu as pltpu


# -----------------------------------------------------------------------------
# Pallas kernel 1: circular cross-correlation via DFT matmuls, fused (H,dk) mean
# -----------------------------------------------------------------------------
def _corr_mean_kernel(q_ref, k_ref, c_ref, s_ref, o_ref, *, inv_scale):
    q = q_ref[0]          # [HD, L]
    k = k_ref[0]          # [HD, L]
    C = c_ref[...]        # [L, L]  cos(2*pi*t*f/L)  (symmetric)
    S = s_ref[...]        # [L, L]  sin(2*pi*t*f/L)  (symmetric)

    # Forward DFT (real/imag parts) of q and k rows -- MXU matmuls.
    qc = jnp.dot(q, C, preferred_element_type=jnp.float32)
    qs = jnp.dot(q, S, preferred_element_type=jnp.float32)
    kc = jnp.dot(k, C, preferred_element_type=jnp.float32)
    ks = jnp.dot(k, S, preferred_element_type=jnp.float32)

    # Q_hat * conj(K_hat): Q_im = -qs, K_im = -ks.  Sum over the HD rows first
    # (the mean is the only consumer of corr); the inverse DFT is linear so it
    # commutes with the reduction -> only [1, L] rows hit the inverse matmuls.
    r_re = jnp.sum(qc * kc + qs * ks, axis=0, keepdims=True)   # [1, L]
    r_im = jnp.sum(qc * ks - qs * kc, axis=0, keepdims=True)   # [1, L]

    # Inverse DFT (real part) + fused mean scaling.
    o_ref[0] = (jnp.dot(r_re, C, preferred_element_type=jnp.float32)
                - jnp.dot(r_im, S, preferred_element_type=jnp.float32)) * inv_scale


def _circular_corr_mean(q2, k2):
    """q2, k2: [B*V, HD, L] f32 -> mean over HD rows of circular corr: [B*V, L]."""
    BV, HD, L = q2.shape
    t = np.arange(L)
    ang = 2.0 * np.pi * np.outer(t, t) / L
    cosM = jnp.asarray(np.cos(ang), jnp.float32)
    sinM = jnp.asarray(np.sin(ang), jnp.float32)

    kernel = functools.partial(_corr_mean_kernel, inv_scale=1.0 / (L * HD))
    out = pl.pallas_call(
        kernel,
        out_shape=jax.ShapeDtypeStruct((BV, 1, L), jnp.float32),
        grid=(BV,),
        in_specs=[pl.BlockSpec((1, HD, L), lambda i: (i, 0, 0)),
                  pl.BlockSpec((1, HD, L), lambda i: (i, 0, 0)),
                  pl.BlockSpec((L, L), lambda i: (0, 0)),   # DFT mats: resident
                  pl.BlockSpec((L, L), lambda i: (0, 0))],
        out_specs=pl.BlockSpec((1, 1, L), lambda i: (i, 0, 0)),
        compiler_params=pltpu.CompilerParams(dimension_semantics=("parallel",)),
    )(q2, k2, cosM, sinM)
    return out[:, 0, :]


# -----------------------------------------------------------------------------
# Pallas kernel 2: time-delay aggregation.
#   out[b, v, m, l] = sum_k w[b,v,k] * values[b, v, m, (l + delay[b,v,k]) % L]
# delay indices + softmax weights come in through SMEM scalar prefetch; the
# K-term weighted circular-shift matrix A[l_out, l_in] is built in-kernel from
# iotas (no [B, V, L, L] HBM array), then applied with one MXU matmul.
# -----------------------------------------------------------------------------
def _agg_kernel(idx_ref, w_ref, v_ref, o_ref, *, V, K, L):
    b = pl.program_id(0)
    v = pl.program_id(1)
    vals = v_ref[0, 0]                                        # [Hd, L]

    l_out = jax.lax.broadcasted_iota(jnp.int32, (L, L), 0)
    l_in = jax.lax.broadcasted_iota(jnp.int32, (L, L), 1)
    diff = l_in - l_out                                       # in (-L, L)

    base = (b * V + v) * K
    A = jnp.zeros((L, L), jnp.float32)
    for k in range(K):          # K = int(factor * log L): 2..6, tiny static unroll
        d = idx_ref[base + k]   # int32 scalar from SMEM
        w = w_ref[base + k]     # f32 scalar from SMEM
        # l_in == (l_out + d) % L  <=>  (l_in - l_out) == d  or  == d - L
        hit = (diff == d) | (diff == d - L)
        A = A + jnp.where(hit, w, 0.0)

    # agg[m, l_out] = sum_{l_in} vals[m, l_in] * A[l_out, l_in]
    o_ref[0, 0] = jax.lax.dot_general(
        vals, A, (((1,), (1,)), ((), ())), preferred_element_type=jnp.float32)


def _time_delay_agg(v2, idx_flat, w_flat, top_k):
    """v2: [B, V, Hd, L]; idx_flat/w_flat: [B*V*top_k] -> [B, V, Hd, L]."""
    B, V, Hd, L = v2.shape
    kernel = functools.partial(_agg_kernel, V=V, K=top_k, L=L)
    return pl.pallas_call(
        kernel,
        out_shape=jax.ShapeDtypeStruct((B, V, Hd, L), jnp.float32),
        grid_spec=pltpu.PrefetchScalarGridSpec(
            num_scalar_prefetch=2,
            grid=(B, V),
            in_specs=[pl.BlockSpec((1, 1, Hd, L),
                                   lambda b, v, idx, w: (b, v, 0, 0))],
            out_specs=pl.BlockSpec((1, 1, Hd, L),
                                   lambda b, v, idx, w: (b, v, 0, 0)),
        ),
        compiler_params=pltpu.CompilerParams(
            dimension_semantics=("parallel", "parallel")),
    )(idx_flat, w_flat, v2)


# -----------------------------------------------------------------------------
# Full forward pass (glue in plain JAX: transposes, top-k, softmax).
# -----------------------------------------------------------------------------
def autocorrelation_forward(queries, keys, values, factor=1, training=True):
    B, L, V, H, dk = queries.shape
    S = values.shape[1]
    dv = values.shape[-1]

    if L > S:
        values = jnp.concatenate(
            [values, jnp.zeros((B, L - S, V, H, dv), values.dtype)], axis=1)
        keys = jnp.concatenate(
            [keys, jnp.zeros((B, L - S, V, H, dk), keys.dtype)], axis=1)
    else:
        values = values[:, :L]
        keys = keys[:, :L]

    # [B, L, V, H, d] -> [B, V, H, d, L]  (time on the lane axis)
    q2 = jnp.transpose(queries, (0, 2, 3, 4, 1)).astype(jnp.float32)
    k2 = jnp.transpose(keys, (0, 2, 3, 4, 1)).astype(jnp.float32)
    v2 = jnp.transpose(values, (0, 2, 3, 4, 1)).astype(jnp.float32)
    q2 = q2.reshape(B * V, H * dk, L)
    k2 = k2.reshape(B * V, H * dk, L)
    v2 = v2.reshape(B, V, H * dv, L)

    # ---- kernel 1: period-based dependency discovery (corr mean over H, dk) ----
    mean_value = _circular_corr_mean(q2, k2).reshape(B, V, L)   # [B, V, L]

    # ---- top-k delays + softmax weights (tiny, plain JAX glue) ----
    top_k = int(factor * math.log(L))
    if training:
        # nn.Module default (self.training == True): indices shared across batch.
        batch_mean = mean_value.mean(axis=0)                    # [V, L]
        _, index = jax.lax.top_k(batch_mean, top_k)             # [V, K]
        index_b = jnp.broadcast_to(index[None], (B, V, top_k))  # [B, V, K]
        weights = jnp.take_along_axis(mean_value, index_b, axis=-1)
    else:
        weights, index_b = jax.lax.top_k(mean_value, top_k)     # [B, V, K]
    tmp_corr = jax.nn.softmax(weights, axis=-1)                 # [B, V, K]

    idx_flat = index_b.astype(jnp.int32).reshape(-1)            # [B*V*K]
    w_flat = tmp_corr.astype(jnp.float32).reshape(-1)           # [B*V*K]

    # ---- kernel 2: time-delay aggregation ----
    agg = _time_delay_agg(v2, idx_flat, w_flat, top_k)          # [B, V, H*dv, L]
    agg = agg.reshape(B, V, H, dv, L)
    # delays_agg [B,H,d,V,L].permute(0,4,3,2,1) == transpose([B,V,H,d,L], (0,4,1,3,2))
    return jnp.transpose(agg, (0, 4, 1, 3, 2))                  # [B, L, V, d, H]


# -----------------------------------------------------------------------------
# NumPy reference (mirrors the PyTorch forward, training=True path, float64 FFT)
# -----------------------------------------------------------------------------
def autocorrelation_ref_np(q, k, v, factor=1):
    q = np.asarray(q, np.float64)
    k = np.asarray(k, np.float64)
    v = np.asarray(v, np.float64)
    B, L, V, H, dk = q.shape
    S = v.shape[1]
    if L > S:
        v = np.concatenate([v, np.zeros((B, L - S) + v.shape[2:])], axis=1)
        k = np.concatenate([k, np.zeros((B, L - S) + k.shape[2:])], axis=1)
    else:
        v = v[:, :L]
        k = k[:, :L]
    qp = np.transpose(q, (0, 3, 4, 2, 1))
    kp = np.transpose(k, (0, 3, 4, 2, 1))
    vp = np.transpose(v, (0, 3, 4, 2, 1))
    corr = np.fft.irfft(np.fft.rfft(qp, axis=-1) * np.conj(np.fft.rfft(kp, axis=-1)),
                        n=L, axis=-1)
    top_k = int(factor * math.log(L))
    mean_value = corr.mean(axis=(1, 2))                       # [B, V, L]
    index = np.argsort(-mean_value.mean(axis=0), axis=-1)[:, :top_k]   # [V, K]
    weights = np.take_along_axis(
        mean_value, np.broadcast_to(index[None], (B, V, top_k)), axis=-1)
    e = np.exp(weights - weights.max(axis=-1, keepdims=True))
    w = e / e.sum(axis=-1, keepdims=True)                     # [B, V, K]
    agg = np.zeros_like(vp)
    for kk in range(top_k):
        for vi in range(V):
            delay = int(index[vi, kk])
            rolled = np.roll(vp[:, :, :, vi, :], -delay, axis=-1)
            agg[:, :, :, vi, :] += rolled * w[:, vi, kk][:, None, None, None]
    return np.transpose(agg, (0, 4, 3, 2, 1))                 # [B, L, V, d, H]


if __name__ == "__main__":
    key = jax.random.PRNGKey(0)
    B, L, V, H, d = 2, 16, 4, 2, 4
    kq, kk, kv = jax.random.split(key, 3)
    queries = jax.random.normal(kq, (B, L, V, H, d), jnp.float32)
    keys = jax.random.normal(kk, (B, L, V, H, d), jnp.float32)
    values = jax.random.normal(kv, (B, L, V, H, d), jnp.float32)

    out = autocorrelation_forward(queries, keys, values, factor=1, training=True)
    out = jax.block_until_ready(out)

    ref = autocorrelation_ref_np(queries, keys, values, factor=1)
    np.testing.assert_allclose(np.asarray(out), ref, rtol=1e-3, atol=1e-4)
    assert out.shape == (B, L, V, d, H)
    print("KERNEL_OK")
</pallas_src>

<mosaic_0001>
module attributes {stable_mosaic.version = 11 : i64} {
  func.func @_corr_mean_kernel(%arg0: i32, %arg1: memref<1x8x16xf32, #tpu.memory_space<vmem>>, %arg2: memref<1x8x16xf32, #tpu.memory_space<vmem>>, %arg3: memref<16x16xf32, #tpu.memory_space<vmem>>, %arg4: memref<16x16xf32, #tpu.memory_space<vmem>>, %arg5: memref<1x1x16xf32, #tpu.memory_space<vmem>>) attributes {dimension_semantics = [#tpu.dimension_semantics<parallel>], iteration_bounds = array<i64: 8>, scalar_prefetch = 0 : i64, scratch_operands = 0 : i64, tpu.core_type = #tpu.core_type<tc>, window_params = [{transform_indices = @transform_0, window_bounds = array<i64: 1, 8, 16>}, {transform_indices = @transform_1, window_bounds = array<i64: 1, 8, 16>}, {pipeline_mode = #tpu.pipeline_mode<synchronous>, transform_indices = @transform_2, window_bounds = array<i64: 16, 16>}, {pipeline_mode = #tpu.pipeline_mode<synchronous>, transform_indices = @transform_3, window_bounds = array<i64: 16, 16>}, {transform_indices = @transform_4, window_bounds = array<i64: 1, 1, 16>}]} {
    %c0 = arith.constant 0 : index
    %c0_0 = arith.constant 0 : index
    %c0_1 = arith.constant 0 : index
    %0 = vector.load %arg1[%c0, %c0_0, %c0_1] : memref<1x8x16xf32, #tpu.memory_space<vmem>>, vector<1x8x16xf32>
    %1 = vector.shape_cast %0 : vector<1x8x16xf32> to vector<8x16xf32>
    %c0_2 = arith.constant 0 : index
    %c0_3 = arith.constant 0 : index
    %c0_4 = arith.constant 0 : index
    %2 = vector.load %arg2[%c0_2, %c0_3, %c0_4] : memref<1x8x16xf32, #tpu.memory_space<vmem>>, vector<1x8x16xf32>
    %3 = vector.shape_cast %2 : vector<1x8x16xf32> to vector<8x16xf32>
    %c0_5 = arith.constant 0 : index
    %c0_6 = arith.constant 0 : index
    %4 = vector.load %arg3[%c0_5, %c0_6] : memref<16x16xf32, #tpu.memory_space<vmem>>, vector<16x16xf32>
    %c0_7 = arith.constant 0 : index
    %c0_8 = arith.constant 0 : index
    %5 = vector.load %arg4[%c0_7, %c0_8] : memref<16x16xf32, #tpu.memory_space<vmem>>, vector<16x16xf32>
    %cst = arith.constant dense<0.000000e+00> : vector<8x16xf32>
    %6 = tpu.matmul %1, %4, %cst {dimension_numbers = #tpu.dot_dimension_numbers<[1], [0], [0], [1], [0, 0, 1, 1], [], []>} : vector<8x16xf32>, vector<16x16xf32>, vector<8x16xf32> -> vector<8x16xf32>
    %cst_9 = arith.constant dense<0.000000e+00> : vector<8x16xf32>
    %7 = tpu.matmul %1, %5, %cst_9 {dimension_numbers = #tpu.dot_dimension_numbers<[1], [0], [0], [1], [0, 0, 1, 1], [], []>} : vector<8x16xf32>, vector<16x16xf32>, vector<8x16xf32> -> vector<8x16xf32>
    %cst_10 = arith.constant dense<0.000000e+00> : vector<8x16xf32>
    %8 = tpu.matmul %3, %4, %cst_10 {dimension_numbers = #tpu.dot_dimension_numbers<[1], [0], [0], [1], [0, 0, 1, 1], [], []>} : vector<8x16xf32>, vector<16x16xf32>, vector<8x16xf32> -> vector<8x16xf32>
    %cst_11 = arith.constant dense<0.000000e+00> : vector<8x16xf32>
    %9 = tpu.matmul %3, %5, %cst_11 {dimension_numbers = #tpu.dot_dimension_numbers<[1], [0], [0], [1], [0, 0, 1, 1], [], []>} : vector<8x16xf32>, vector<16x16xf32>, vector<8x16xf32> -> vector<8x16xf32>
    %10 = arith.mulf %6, %8 : vector<8x16xf32>
    %11 = arith.mulf %7, %9 : vector<8x16xf32>
    %12 = arith.addf %10, %11 : vector<8x16xf32>
    %cst_12 = arith.constant dense<0.000000e+00> : vector<16xf32>
    %13 = vector.multi_reduction <add>, %12, %cst_12 [0] : vector<8x16xf32> to vector<16xf32>
    %14 = vector.shape_cast %13 : vector<16xf32> to vector<1x16xf32>
    %15 = arith.mulf %6, %9 : vector<8x16xf32>
    %16 = arith.mulf %7, %8 : vector<8x16xf32>
    %17 = arith.subf %15, %16 : vector<8x16xf32>
    %cst_13 = arith.constant dense<0.000000e+00> : vector<16xf32>
    %18 = vector.multi_reduction <add>, %17, %cst_13 [0] : vector<8x16xf32> to vector<16xf32>
    %19 = vector.shape_cast %18 : vector<16xf32> to vector<1x16xf32>
    %cst_14 = arith.constant dense<0.000000e+00> : vector<1x16xf32>
    %20 = tpu.matmul %14, %4, %cst_14 {dimension_numbers = #tpu.dot_dimension_numbers<[1], [0], [0], [1], [0, 0, 1, 1], [], []>} : vector<1x16xf32>, vector<16x16xf32>, vector<1x16xf32> -> vector<1x16xf32>
    %cst_15 = arith.constant dense<0.000000e+00> : vector<1x16xf32>
    %21 = tpu.matmul %19, %5, %cst_15 {dimension_numbers = #tpu.dot_dimension_numbers<[1], [0], [0], [1], [0, 0, 1, 1], [], []>} : vector<1x16xf32>, vector<16x16xf32>, vector<1x16xf32> -> vector<1x16xf32>
    %22 = arith.subf %20, %21 : vector<1x16xf32>
    %cst_16 = arith.constant 7.812500e-03 : f32
    %23 = vector.broadcast %cst_16 : f32 to vector<1x16xf32>
    %24 = arith.mulf %22, %23 : vector<1x16xf32>
    %c0_17 = arith.constant 0 : index
    %c0_18 = arith.constant 0 : index
    %c0_19 = arith.constant 0 : index
    %25 = vector.load %arg5[%c0_17, %c0_18, %c0_19] : memref<1x1x16xf32, #tpu.memory_space<vmem>>, vector<1x1x16xf32>
    %26 = vector.shape_cast %25 : vector<1x1x16xf32> to vector<1x16xf32>
    %27 = vector.shape_cast %24 : vector<1x16xf32> to vector<1x1x16xf32>
    tpu.vector_store %arg5[%c0_17, %c0_18, %c0_19], %27 {strides = array<i32>} : memref<1x1x16xf32, #tpu.memory_space<vmem>>, vector<1x1x16xf32>,
    return
  }
  func.func @transform_0(%arg0: i32) -> (i32, i32, i32) {
    %c0_i32 = arith.constant 0 : i32
    %c0_i32_0 = arith.constant 0 : i32
    %c0_i32_1 = arith.constant 0 : i32
    return %arg0, %c0_i32, %c0_i32_0 : i32, i32, i32
  }
  func.func @transform_1(%arg0: i32) -> (i32, i32, i32) {
    %c0_i32 = arith.constant 0 : i32
    %c0_i32_0 = arith.constant 0 : i32
    %c0_i32_1 = arith.constant 0 : i32
    return %arg0, %c0_i32, %c0_i32_0 : i32, i32, i32
  }
  func.func @transform_2(%arg0: i32) -> (i32, i32) {
    %c0_i32 = arith.constant 0 : i32
    %c0_i32_0 = arith.constant 0 : i32
    %c0_i32_1 = arith.constant 0 : i32
    return %c0_i32, %c0_i32_0 : i32, i32
  }
  func.func @transform_3(%arg0: i32) -> (i32, i32) {
    %c0_i32 = arith.constant 0 : i32
    %c0_i32_0 = arith.constant 0 : i32
    %c0_i32_1 = arith.constant 0 : i32
    return %c0_i32, %c0_i32_0 : i32, i32
  }
  func.func @transform_4(%arg0: i32) -> (i32, i32, i32) {
    %c0_i32 = arith.constant 0 : i32
    %c0_i32_0 = arith.constant 0 : i32
    %c0_i32_1 = arith.constant 0 : i32
    return %arg0, %c0_i32, %c0_i32_0 : i32, i32, i32
  }
}

</mosaic_0001>

<llo_original>
// kernel: tpu_custom_call.1
$region0: #{tpu_custom_call.1}
  #allocation0 [shape = 'u32[]', space=smem, size = 0x4, offset = 0x4, fixed_abs, tag = 'smem constant byte address 0x4 - core index']
  #allocation1 [shape = 'u32[144,128]{1,0:T(1,128)}', space=vmem, size = 0x12000, scoped, tag = 'internal scratch']
  %s0 = inlined_call_operand.hbm [shape: f32[8,8,16], index: 0, kind: input, shape index: {}]
  %s1 = inlined_call_operand.hbm [shape: f32[8,8,16], index: 1, kind: input, shape index: {}]
  %s2 = inlined_call_operand.hbm [shape: f32[16,16], index: 2, kind: input, shape index: {}]
  %s3 = inlined_call_operand.hbm [shape: f32[16,16], index: 3, kind: input, shape index: {}]
  %s4 = inlined_call_operand.hbm [shape: f32[8,1,16], index: 4, kind: output, shape index: {}]
  %s5 = sld [smem:[#allocation0]]
  $region65: #{tpu_custom_call.1} parent=0
    _
  %s7 = ssub.s32 1, %s5
  %s8 = scalar_select 0, %s7, %s5
  $region1: #{tpu_custom_call.1} parent=0
    #allocation2 [shape = 'u8[8192]{0}', space=vmem, size = 0x2000, scoped, tag = 'input window, operand 0']
    #allocation3 [shape = 's32[2]{0}', space=sflag, size = 0x8, scoped, tag = 'scoped memory for tpu_custom_call.1']
    #allocation4 [shape = 's32[2]{0}', space=sflag, size = 0x8, scoped, tag = 'scoped memory for tpu_custom_call.1']
    #allocation5 [shape = 'u8[8192]{0}', space=vmem, size = 0x2000, scoped, tag = 'input window, operand 1']
    #allocation6 [shape = 's32[2]{0}', space=sflag, size = 0x8, scoped, tag = 'scoped memory for tpu_custom_call.1']
    #allocation7 [shape = 'u8[8192]{0}', space=vmem, size = 0x2000, scoped, tag = 'input window, operand 2, single buffered']
    #allocation8 [shape = 'u8[8192]{0}', space=vmem, size = 0x2000, scoped, tag = 'input window, operand 3, single buffered']
    #allocation9 [shape = 's32[1]{0}', space=sflag, size = 0x4, scoped, tag = 'scoped memory for tpu_custom_call.1']
    #allocation10 [shape = 'u8[1024]{0}', space=vmem, size = 0x400, scoped, tag = 'output window, operand 0']
    %9 = vsyncpa [#allocation3], 0
    %s10 = scalar_lea.sflag [#allocation3], 1
    %11 = vsyncpa %s10, 0
    %12 = vsyncpa [#allocation6], 0
    %s13 = scalar_lea.sflag [#allocation6], 1
    %14 = vsyncpa %s13, 0
    %15 = vsyncpa [#allocation9], 0
    %16 = vsyncpa [#allocation4], 0
    %s17 = scalar_lea.sflag [#allocation4], 1
    %18 = vsyncpa %s17, 0
    loop: start=0, step=1, limit=10
    $region2: #{tpu_custom_call.1} parent=1 // loop_pre_header
      _
    $region3: #{tpu_custom_call.1} parent=1 // loop_header
      %s20 = sphi 0, %s24
      %p21 = scmp.ge.s32.totalorder %s20, 10
      %s30 = sphi 0, %s32
      %s33 = sphi 0, %s30
      %s34 = sphi 0, %s33
      %s50 = sphi 0, %s34
      %s56 = sphi 0, %s58
      %s59 = sphi 0, %s56
      %s60 = sphi 0, %s59
      %s76 = sphi 0, %s60
      %s80 = sphi 0, %s80
      %s82 = sphi 0, %s80
      %s83 = sphi 0, %s82
      %s97 = sphi 0, %s83
      %s101 = sphi 0, %s101
      %s103 = sphi 0, %s101
      %s104 = sphi 0, %s103
      %s118 = sphi 0, %s104
      %s124 = sphi 0, %s126
      %s127 = sphi 0, %s124
      %s128 = sphi 0, %s127
      %s144 = sphi 0, %s128
    $region4: #{tpu_custom_call.1} parent=1 // loop_header_branch
      %23 = sbr.rel (%p21) target = $region8
    $region5: #{tpu_custom_call.1} parent=1 // loop_body
      %s25 = ssub.s32 %s20, 1
      %s26 = ssub.s32 %s20, 2
      %s27 = sadd.s32 %s20, 1
      %s28 = ssub.s32 %s20, %s27
      %p29 = scmp.eq.s32.totalorder %s28, 0
      %s31 = sadd.s32 %s30, 1
      %s32 = scalar_select %p29, %s30, %s31
      %p35 = pneg %p29
      %p36 = scmp.eq.s32.totalorder %s20, 7
      %p37 = por %p35, %p36
      %p38 = scmp.ne.s32.totalorder %s30, %s33
      %p39 = scmp.eq.s32.totalorder %s20, 0
      %p40 = por %p38, %p39
      %p41 = scmp.ne.s32.totalorder %s30, %s33
      %p42 = scmp.eq.s32.totalorder %s25, 7
      %p43 = por %p41, %p42
      %p44 = scmp.ne.s32.totalorder %s33, %s34
      %p45 = scmp.eq.s32.totalorder %s25, 0
      %p46 = por %p44, %p45
      %p47 = scmp.ne.s32.totalorder %s33, %s34
      %p48 = scmp.eq.s32.totalorder %s26, 7
      %p49 = por %p47, %p48
      %p51 = scmp.ne.s32.totalorder %s34, %s50
      %p52 = scmp.eq.s32.totalorder %s26, 0
      %p53 = por %p51, %p52
      %s54 = ssub.s32 %s20, %s27
      %p55 = scmp.eq.s32.totalorder %s54, 0
      %s57 = sadd.s32 %s56, 1
      %s58 = scalar_select %p55, %s56, %s57
      %p61 = pneg %p55
      %p62 = scmp.eq.s32.totalorder %s20, 7
      %p63 = por %p61, %p62
      %p64 = scmp.ne.s32.totalorder %s56, %s59
      %p65 = scmp.eq.s32.totalorder %s20, 0
      %p66 = por %p64, %p65
      %p67 = scmp.ne.s32.totalorder %s56, %s59
      %p68 = scmp.eq.s32.totalorder %s25, 7
      %p69 = por %p67, %p68
      %p70 = scmp.ne.s32.totalorder %s59, %s60
      %p71 = scmp.eq.s32.totalorder %s25, 0
      %p72 = por %p70, %p71
      %p73 = scmp.ne.s32.totalorder %s59, %s60
      %p74 = scmp.eq.s32.totalorder %s26, 7
      %p75 = por %p73, %p74
      %p77 = scmp.ne.s32.totalorder %s60, %s76
      %p78 = scmp.eq.s32.totalorder %s26, 0
      %p79 = por %p77, %p78
      %s81 = sadd.s32 %s80, 1
      %p84 = scmp.eq.s32.totalorder %s20, 7
      %p85 = scmp.ne.s32.totalorder %s80, %s82
      %p86 = scmp.eq.s32.totalorder %s20, 0
      %p87 = por %p85, %p86
      %p88 = scmp.ne.s32.totalorder %s80, %s82
      %p89 = scmp.eq.s32.totalorder %s25, 7
      %p90 = por %p88, %p89
      %p91 = scmp.ne.s32.totalorder %s82, %s83
      %p92 = scmp.eq.s32.totalorder %s25, 0
      %p93 = por %p91, %p92
      %p94 = scmp.ne.s32.totalorder %s82, %s83
      %p95 = scmp.eq.s32.totalorder %s26, 7
      %p96 = por %p94, %p95
      %p98 = scmp.ne.s32.totalorder %s83, %s97
      %p99 = scmp.eq.s32.totalorder %s26, 0
      %p100 = por %p98, %p99
      %s102 = sadd.s32 %s101, 1
      %p105 = scmp.eq.s32.totalorder %s20, 7
      %p106 = scmp.ne.s32.totalorder %s101, %s103
      %p107 = scmp.eq.s32.totalorder %s20, 0
      %p108 = por %p106, %p107
      %p109 = scmp.ne.s32.totalorder %s101, %s103
      %p110 = scmp.eq.s32.totalorder %s25, 7
      %p111 = por %p109, %p110
      %p112 = scmp.ne.s32.totalorder %s103, %s104
      %p113 = scmp.eq.s32.totalorder %s25, 0
      %p114 = por %p112, %p113
      %p115 = scmp.ne.s32.totalorder %s103, %s104
      %p116 = scmp.eq.s32.totalorder %s26, 7
      %p117 = por %p115, %p116
      %p119 = scmp.ne.s32.totalorder %s104, %s118
      %p120 = scmp.eq.s32.totalorder %s26, 0
      %p121 = por %p119, %p120
      %s122 = ssub.s32 %s20, %s27
      %p123 = scmp.eq.s32.totalorder %s122, 0
      %s125 = sadd.s32 %s124, 1
      %s126 = scalar_select %p123, %s124, %s125
      %p129 = pneg %p123
      %p130 = scmp.eq.s32.totalorder %s20, 7
      %p131 = por %p129, %p130
      %p132 = scmp.ne.s32.totalorder %s124, %s127
      %p133 = scmp.eq.s32.totalorder %s20, 0
      %p134 = por %p132, %p133
      %p135 = scmp.ne.s32.totalorder %s124, %s127
      %p136 = scmp.eq.s32.totalorder %s25, 7
      %p137 = por %p135, %p136
      %p138 = scmp.ne.s32.totalorder %s127, %s128
      %p139 = scmp.eq.s32.totalorder %s25, 0
      %p140 = por %p138, %p139
      %p141 = scmp.ne.s32.totalorder %s127, %s128
      %p142 = scmp.eq.s32.totalorder %s26, 7
      %p143 = por %p141, %p142
      %p145 = scmp.ne.s32.totalorder %s128, %s144
      %p146 = scmp.eq.s32.totalorder %s26, 0
      %p147 = por %p145, %p146
      %p148 = scmp.le.s32.totalorder 1, %s20
      %p149 = scmp.lt.s32.totalorder %s20, 9
      %p150 = pnand %p148, %p149
      %p151 = pneg %p150
      // Predicated region
      $region9: #{tpu_custom_call.1} parent=5 // pred_check
        _
      $region10: #{tpu_custom_call.1} parent=5 // pred_check_branch
        %153 = sbr.rel (%p150) target = $region12
      $region11: #{tpu_custom_call.1} parent=5 // pred_region
        %s154 = ssub.s32 %s20, 1
        // Predicated region
        $region13: #{tpu_custom_call.1} parent=11 // pred_check
          %p155 = pneg %p93
        $region14: #{tpu_custom_call.1} parent=11 // pred_check_branch
          %157 = sbr.rel (%p155) target = $region16
        $region15: #{tpu_custom_call.1} parent=11 // pred_region
          %s159 = ssub.s32 256, 256
          %160 = vsyncadd [#allocation6], %s159
          %s161 = sshll.u32 [#allocation7], 4
          %s162 = int_to_ptr.vmem [resolvable:$true] %s161
          %167 = dma.hbm_to_vmem [thread:$0]  %s2, 256, %s162, [#allocation6], 128, 128, 8
        $region16: #{tpu_custom_call.1} parent=11 // pred_fallthru
          _
        // Predicated region
        $region17: #{tpu_custom_call.1} parent=11 // pred_check
          %p168 = pneg %p114
        $region18: #{tpu_custom_call.1} parent=11 // pred_check_branch
          %170 = sbr.rel (%p168) target = $region20
        $region19: #{tpu_custom_call.1} parent=11 // pred_region
          %s172 = ssub.s32 256, 256
          %173 = vsyncadd [#allocation9], %s172
          %s174 = sshll.u32 [#allocation8], 4
          %s175 = int_to_ptr.vmem [resolvable:$true] %s174
          %180 = dma.hbm_to_vmem [thread:$0]  %s3, 256, %s175, [#allocation9], 128, 128, 8
        $region20: #{tpu_custom_call.1} parent=11 // pred_fallthru
          _
      $region12: #{tpu_custom_call.1} parent=5 // pred_fallthru
        _
      %p181 = scmp.lt.s32.totalorder %s20, 8
      // Predicated region
      $region21: #{tpu_custom_call.1} parent=5 // pred_check
        %p182 = pneg %p181
      $region22: #{tpu_custom_call.1} parent=5 // pred_check_branch
        %184 = sbr.rel (%p182) target = $region24
      $region23: #{tpu_custom_call.1} parent=5 // pred_region
        // Predicated region
        $region25: #{tpu_custom_call.1} parent=23 // pred_check
          %p185 = pneg %p40
        $region26: #{tpu_custom_call.1} parent=23 // pred_check_branch
          %187 = sbr.rel (%p185) target = $region28
        $region27: #{tpu_custom_call.1} parent=23 // pred_region
          %s188 = sand.u32 %s30, 1
          %s189 = scalar_lea.sflag [#allocation3], %s188
          %s190 = sand.u32 %s30, 1
          %s191 = smul.addr %s190, 8
          %s192 = scalar_lea.vmem [#allocation2], %s191
          %s194 = ssub.s32 128, 128
          %195 = vsyncadd %s189, %s194
          %s196 = smul.addr %s20, 128
          %s197 = scalar_lea.hbm %s0, %s196
          %s199 = sshll.u32 %s192, 4
          %s200 = int_to_ptr.vmem [resolvable:$true] %s199
          %202 = dma.hbm_to_vmem [thread:$0]  %s197, 128, %s200, %s189
        $region28: #{tpu_custom_call.1} parent=23 // pred_fallthru
          _
        // Predicated region
        $region29: #{tpu_custom_call.1} parent=23 // pred_check
          %p203 = pneg %p66
        $region30: #{tpu_custom_call.1} parent=23 // pred_check_branch
          %205 = sbr.rel (%p203) target = $region32
        $region31: #{tpu_custom_call.1} parent=23 // pred_region
          %s206 = sand.u32 %s20, 1
          %s207 = scalar_lea.sflag [#allocation6], %s206
          %s208 = sand.u32 %s56, 1
          %s209 = smul.addr %s208, 8
          %s210 = scalar_lea.vmem [#allocation5], %s209
          %s212 = ssub.s32 128, 128
          %213 = vsyncadd %s207, %s212
          %s214 = smul.addr %s20, 128
          %s215 = scalar_lea.hbm %s1, %s214
          %s217 = sshll.u32 %s210, 4
          %s218 = int_to_ptr.vmem [resolvable:$true] %s217
          %220 = dma.hbm_to_vmem [thread:$0]  %s215, 128, %s218, %s207
        $region32: #{tpu_custom_call.1} parent=23 // pred_fallthru
          _
      $region24: #{tpu_custom_call.1} parent=5 // pred_fallthru
        _
      %p221 = scmp.le.s32.totalorder 1, %s20
      %p222 = scmp.lt.s32.totalorder %s20, 9
      %p223 = pnand %p221, %p222
      %p224 = pneg %p223
      // Predicated region
      $region33: #{tpu_custom_call.1} parent=5 // pred_check
        _
      $region34: #{tpu_custom_call.1} parent=5 // pred_check_branch
        %226 = sbr.rel (%p223) target = $region36
      $region35: #{tpu_custom_call.1} parent=5 // pred_region
        %s227 = ssub.s32 %s20, 1
        %s228 = sand.u32 %s33, 1
        %s229 = scalar_lea.sflag [#allocation3], %s228
        %s230 = sand.u32 %s33, 1
        %s231 = smul.addr %s230, 8
        %s232 = scalar_lea.vmem [#allocation2], %s231
        // Predicated region
        $region37: #{tpu_custom_call.1} parent=35 // pred_check
          %p233 = pneg %p46
        $region38: #{tpu_custom_call.1} parent=35 // pred_check_branch
          %235 = sbr.rel (%p233) target = $region40
        $region39: #{tpu_custom_call.1} parent=35 // pred_region
          %236 = dma.done %s229, 128
        $region40: #{tpu_custom_call.1} parent=35 // pred_fallthru
          _
        %s237 = sand.u32 %s25, 1
        %s238 = scalar_lea.sflag [#allocation6], %s237
        %s239 = sand.u32 %s59, 1
        %s240 = smul.addr %s239, 8
        %s241 = scalar_lea.vmem [#allocation5], %s240
        // Predicated region
        $region41: #{tpu_custom_call.1} parent=35 // pred_check
          %p242 = pneg %p72
        $region42: #{tpu_custom_call.1} parent=35 // pred_check_branch
          %244 = sbr.rel (%p242) target = $region44
        $region43: #{tpu_custom_call.1} parent=35 // pred_region
          %245 = dma.done %s238, 128
        $region44: #{tpu_custom_call.1} parent=35 // pred_fallthru
          _
        // Predicated region
        $region45: #{tpu_custom_call.1} parent=35 // pred_check
          %p246 = pneg %p93
        $region46: #{tpu_custom_call.1} parent=35 // pred_check_branch
          %248 = sbr.rel (%p246) target = $region48
        $region47: #{tpu_custom_call.1} parent=35 // pred_region
          %249 = dma.done [#allocation6], 256
        $region48: #{tpu_custom_call.1} parent=35 // pred_fallthru
          _
        // Predicated region
        $region49: #{tpu_custom_call.1} parent=35 // pred_check
          %p250 = pneg %p114
        $region50: #{tpu_custom_call.1} parent=35 // pred_check_branch
          %252 = sbr.rel (%p250) target = $region52
        $region51: #{tpu_custom_call.1} parent=35 // pred_region
          %253 = dma.done [#allocation9], 256
        $region52: #{tpu_custom_call.1} parent=35 // pred_fallthru
          _
        %s254 = sand.u32 %s33, 1
        %s255 = scalar_lea.sflag [#allocation3], %s254
        %s256 = sand.u32 %s33, 1
        %s257 = smul.addr %s256, 8
        %s258 = scalar_lea.vmem [#allocation2], %s257
        %p259 = pneg %p46
        %p260 = pneg %p43
        %s261 = sand.u32 %s25, 1
        %s262 = scalar_lea.sflag [#allocation6], %s261
        %s263 = sand.u32 %s59, 1
        %s264 = smul.addr %s263, 8
        %s265 = scalar_lea.vmem [#allocation5], %s264
        %p266 = pneg %p72
        %p267 = pneg %p69
        %p268 = pneg %p93
        %p269 = pneg %p90
        %p270 = pneg %p114
        %p271 = pneg %p111
        %p272 = pneg %p140
        %p273 = pneg %p137
        %s274 = sand.u32 %s127, 1
        %s275 = scalar_lea.sflag [#allocation4], %s274
        %s276 = sand.u32 %s127, 1
        %s277 = scalar_lea.vmem [#allocation10], %s276
        %v278 = vld [vmem:[%s232] sm:$0xff]
        %v279 = vld [vmem:[%s241] sm:$0xff]
        %v280 = vld [vmem:[#allocation7] sm:$0xff]
        %v281 = vld [vmem:[#allocation7 + $0x8] sm:$0xff]
        %v282 = vld [vmem:[#allocation8] sm:$0xff]
        %v283 = vld [vmem:[#allocation8 + $0x8] sm:$0xff]
        %vm284 = vcmask 130048
        %v286 = vsel %vm284, %v278, 0
        %288 = vmatprep.subr.mxu0 0.0
        %289 = vmatpush1.msra.mxu0 %v280
        %290 = vmatprep.subr.mxu0 0.0
        %291 = vmatpush1.msra.mxu0 %v281
        %292 = vmatprep.subr.mxu0 0.0
        %293 = vmatpush1.msra.mxu0 0.0
        %294 = vmatprep.subr.mxu0 0.0
        %295 = vmatpush1.msra.mxu0 0.0
        %296 = vmatprep.subr.mxu0 0.0
        %297 = vmatpush1.msra.mxu0 0.0
        %298 = vmatprep.subr.mxu0 0.0
        %299 = vmatpush1.msra.mxu0 0.0
        %300 = vmatprep.subr.mxu0 0.0
        %301 = vmatpush1.msra.mxu0 0.0
        %302 = vmatprep.subr.mxu0 0.0
        %303 = vmatpush1.msra.mxu0 0.0
        %304 = vmatprep.subr.mxu0 0.0
        %305 = vmatpush1.msra.mxu0 0.0
        %306 = vmatprep.subr.mxu0 0.0
        %307 = vmatpush1.msra.mxu0 0.0
        %308 = vmatprep.subr.mxu0 0.0
        %309 = vmatpush1.msra.mxu0 0.0
        %310 = vmatprep.subr.mxu0 0.0
        %311 = vmatpush1.msra.mxu0 0.0
        %312 = vmatprep.subr.mxu0 0.0
        %313 = vmatpush1.msra.mxu0 0.0
        %314 = vmatprep.subr.mxu0 0.0
        %315 = vmatpush1.msra.mxu0 0.0
        %316 = vmatprep.subr.mxu0 0.0
        %317 = vmatpush1.msra.mxu0 0.0
        %318 = vmatprep.subr.mxu0 0.0
        %319 = vmatpush1.msra.mxu0 0.0
        %320 = vmatprep.subr.mxu0 0.0
        %321 = vmatpush1.msra.mxu0 0.0
        %322 = vmatprep.subr.mxu0 0.0
        %323 = vmatpush1.msra.mxu0 0.0
        %324 = vmatprep.subr.mxu0 0.0
        %325 = vmatpush1.msra.mxu0 0.0
        %326 = vmatprep.subr.mxu0 0.0
        %327 = vmatpush1.msra.mxu0 0.0
        %328 = vmatprep.subr.mxu0 0.0
        %329 = vmatpush1.msra.mxu0 0.0
        %330 = vmatprep.subr.mxu0 0.0
        %331 = vmatpush1.msra.mxu0 0.0
        %332 = vmatprep.subr.mxu0 0.0
        %333 = vmatpush1.msra.mxu0 0.0
        %334 = vmatprep.subr.mxu0 0.0
        %335 = vmatpush1.msra.mxu0 0.0
        %336 = vmatprep.subr.mxu0 0.0
        %337 = vmatpush1.msra.mxu0 0.0
        %338 = vmatprep.subr.mxu0 0.0
        %339 = vmatpush1.msra.mxu0 0.0
        %340 = vmatprep.subr.mxu0 0.0
        %341 = vmatpush1.msra.mxu0 0.0
        %342 = vmatprep.subr.mxu0 0.0
        %343 = vmatpush1.msra.mxu0 0.0
        %344 = vmatprep.subr.mxu0 0.0
        %345 = vmatpush1.msra.mxu0 0.0
        %346 = vmatprep.subr.mxu0 0.0
        %347 = vmatpush1.msra.mxu0 0.0
        %348 = vmatprep.subr.mxu0 0.0
        %349 = vmatpush1.msra.mxu0 0.0
        %350 = vmatprep.subr.mxu0 0.0
        %351 = vmatpush1.msra.mxu0 0.0
        %352 = vmatprep.mubr.f32.mxu0 0.0
        %353 = vmatmul.mubr.f32.gmra.mrb[0].mxu0 %v286
        %v354 = vpop.f32.mrb[0].mxu0
        %v355 = vadd.f32 0.0, %v354
        %v356 = vpop.f32.mrb[0].mxu0
        %357 = vdwg.mxu0
        %358 = vmatprep.subr.mxu0 0.0
        %359 = vmatpush1.msra.mxu0 %v282
        %360 = vmatprep.subr.mxu0 0.0
        %361 = vmatpush1.msra.mxu0 %v283
        %362 = vmatprep.subr.mxu0 0.0
        %363 = vmatpush1.msra.mxu0 0.0
        %364 = vmatprep.subr.mxu0 0.0
        %365 = vmatpush1.msra.mxu0 0.0
        %366 = vmatprep.subr.mxu0 0.0
        %367 = vmatpush1.msra.mxu0 0.0
        %368 = vmatprep.subr.mxu0 0.0
        %369 = vmatpush1.msra.mxu0 0.0
        %370 = vmatprep.subr.mxu0 0.0
        %371 = vmatpush1.msra.mxu0 0.0
        %372 = vmatprep.subr.mxu0 0.0
        %373 = vmatpush1.msra.mxu0 0.0
        %374 = vmatprep.subr.mxu0 0.0
        %375 = vmatpush1.msra.mxu0 0.0
        %376 = vmatprep.subr.mxu0 0.0
        %377 = vmatpush1.msra.mxu0 0.0
        %378 = vmatprep.subr.mxu0 0.0
        %379 = vmatpush1.msra.mxu0 0.0
        %380 = vmatprep.subr.mxu0 0.0
        %381 = vmatpush1.msra.mxu0 0.0
        %382 = vmatprep.subr.mxu0 0.0
        %383 = vmatpush1.msra.mxu0 0.0
        %384 = vmatprep.subr.mxu0 0.0
        %385 = vmatpush1.msra.mxu0 0.0
        %386 = vmatprep.subr.mxu0 0.0
        %387 = vmatpush1.msra.mxu0 0.0
        %388 = vmatprep.subr.mxu0 0.0
        %389 = vmatpush1.msra.mxu0 0.0
        %390 = vmatprep.subr.mxu0 0.0
        %391 = vmatpush1.msra.mxu0 0.0
        %392 = vmatprep.subr.mxu0 0.0
        %393 = vmatpush1.msra.mxu0 0.0
        %394 = vmatprep.subr.mxu0 0.0
        %395 = vmatpush1.msra.mxu0 0.0
        %396 = vmatprep.subr.mxu0 0.0
        %397 = vmatpush1.msra.mxu0 0.0
        %398 = vmatprep.subr.mxu0 0.0
        %399 = vmatpush1.msra.mxu0 0.0
        %400 = vmatprep.subr.mxu0 0.0
        %401 = vmatpush1.msra.mxu0 0.0
        %402 = vmatprep.subr.mxu0 0.0
        %403 = vmatpush1.msra.mxu0 0.0
        %404 = vmatprep.subr.mxu0 0.0
        %405 = vmatpush1.msra.mxu0 0.0
        %406 = vmatprep.subr.mxu0 0.0
        %407 = vmatpush1.msra.mxu0 0.0
        %408 = vmatprep.subr.mxu0 0.0
        %409 = vmatpush1.msra.mxu0 0.0
        %410 = vmatprep.subr.mxu0 0.0
        %411 = vmatpush1.msra.mxu0 0.0
        %412 = vmatprep.subr.mxu0 0.0
        %413 = vmatpush1.msra.mxu0 0.0
        %414 = vmatprep.subr.mxu0 0.0
        %415 = vmatpush1.msra.mxu0 0.0
        %416 = vmatprep.subr.mxu0 0.0
        %417 = vmatpush1.msra.mxu0 0.0
        %418 = vmatprep.subr.mxu0 0.0
        %419 = vmatpush1.msra.mxu0 0.0
        %420 = vmatprep.subr.mxu0 0.0
        %421 = vmatpush1.msra.mxu0 0.0
        %422 = vmatprep.mubr.f32.mxu0 0.0
        %423 = vmatmul.mubr.f32.gmra.mrb[0].mxu0 %v286
        %v424 = vpop.f32.mrb[0].mxu0
        %v425 = vadd.f32 0.0, %v424
        %v426 = vpop.f32.mrb[0].mxu0
        %427 = vdwg.mxu0
        %v429 = vsel %vm284, %v279, 0
        %431 = vmatprep.subr.mxu0 0.0
        %432 = vmatpush1.msra.mxu0 %v280
        %433 = vmatprep.subr.mxu0 0.0
        %434 = vmatpush1.msra.mxu0 %v281
        %435 = vmatprep.subr.mxu0 0.0
        %436 = vmatpush1.msra.mxu0 0.0
        %437 = vmatprep.subr.mxu0 0.0
        %438 = vmatpush1.msra.mxu0 0.0
        %439 = vmatprep.subr.mxu0 0.0
        %440 = vmatpush1.msra.mxu0 0.0
        %441 = vmatprep.subr.mxu0 0.0
        %442 = vmatpush1.msra.mxu0 0.0
        %443 = vmatprep.subr.mxu0 0.0
        %444 = vmatpush1.msra.mxu0 0.0
        %445 = vmatprep.subr.mxu0 0.0
        %446 = vmatpush1.msra.mxu0 0.0
        %447 = vmatprep.subr.mxu0 0.0
        %448 = vmatpush1.msra.mxu0 0.0
        %449 = vmatprep.subr.mxu0 0.0
        %450 = vmatpush1.msra.mxu0 0.0
        %451 = vmatprep.subr.mxu0 0.0
        %452 = vmatpush1.msra.mxu0 0.0
        %453 = vmatprep.subr.mxu0 0.0
        %454 = vmatpush1.msra.mxu0 0.0
        %455 = vmatprep.subr.mxu0 0.0
        %456 = vmatpush1.msra.mxu0 0.0
        %457 = vmatprep.subr.mxu0 0.0
        %458 = vmatpush1.msra.mxu0 0.0
        %459 = vmatprep.subr.mxu0 0.0
        %460 = vmatpush1.msra.mxu0 0.0
        %461 = vmatprep.subr.mxu0 0.0
        %462 = vmatpush1.msra.mxu0 0.0
        %463 = vmatprep.subr.mxu0 0.0
        %464 = vmatpush1.msra.mxu0 0.0
        %465 = vmatprep.subr.mxu0 0.0
        %466 = vmatpush1.msra.mxu0 0.0
        %467 = vmatprep.subr.mxu0 0.0
        %468 = vmatpush1.msra.mxu0 0.0
        %469 = vmatprep.subr.mxu0 0.0
        %470 = vmatpush1.msra.mxu0 0.0
        %471 = vmatprep.subr.mxu0 0.0
        %472 = vmatpush1.msra.mxu0 0.0
        %473 = vmatprep.subr.mxu0 0.0
        %474 = vmatpush1.msra.mxu0 0.0
        %475 = vmatprep.subr.mxu0 0.0
        %476 = vmatpush1.msra.mxu0 0.0
        %477 = vmatprep.subr.mxu0 0.0
        %478 = vmatpush1.msra.mxu0 0.0
        %479 = vmatprep.subr.mxu0 0.0
        %480 = vmatpush1.msra.mxu0 0.0
        %481 = vmatprep.subr.mxu0 0.0
        %482 = vmatpush1.msra.mxu0 0.0
        %483 = vmatprep.subr.mxu0 0.0
        %484 = vmatpush1.msra.mxu0 0.0
        %485 = vmatprep.subr.mxu0 0.0
        %486 = vmatpush1.msra.mxu0 0.0
        %487 = vmatprep.subr.mxu0 0.0
        %488 = vmatpush1.msra.mxu0 0.0
        %489 = vmatprep.subr.mxu0 0.0
        %490 = vmatpush1.msra.mxu0 0.0
        %491 = vmatprep.subr.mxu0 0.0
        %492 = vmatpush1.msra.mxu0 0.0
        %493 = vmatprep.subr.mxu0 0.0
        %494 = vmatpush1.msra.mxu0 0.0
        %495 = vmatprep.mubr.f32.mxu0 0.0
        %496 = vmatmul.mubr.f32.gmra.mrb[0].mxu0 %v429
        %v497 = vpop.f32.mrb[0].mxu0
        %v498 = vadd.f32 0.0, %v497
        %v499 = vpop.f32.mrb[0].mxu0
        %500 = vdwg.mxu0
        %501 = vmatprep.subr.mxu0 0.0
        %502 = vmatpush1.msra.mxu0 %v282
        %503 = vmatprep.subr.mxu0 0.0
        %504 = vmatpush1.msra.mxu0 %v283
        %505 = vmatprep.subr.mxu0 0.0
        %506 = vmatpush1.msra.mxu0 0.0
        %507 = vmatprep.subr.mxu0 0.0
        %508 = vmatpush1.msra.mxu0 0.0
        %509 = vmatprep.subr.mxu0 0.0
        %510 = vmatpush1.msra.mxu0 0.0
        %511 = vmatprep.subr.mxu0 0.0
        %512 = vmatpush1.msra.mxu0 0.0
        %513 = vmatprep.subr.mxu0 0.0
        %514 = vmatpush1.msra.mxu0 0.0
        %515 = vmatprep.subr.mxu0 0.0
        %516 = vmatpush1.msra.mxu0 0.0
        %517 = vmatprep.subr.mxu0 0.0
        %518 = vmatpush1.msra.mxu0 0.0
        %519 = vmatprep.subr.mxu0 0.0
        %520 = vmatpush1.msra.mxu0 0.0
        %521 = vmatprep.subr.mxu0 0.0
        %522 = vmatpush1.msra.mxu0 0.0
        %523 = vmatprep.subr.mxu0 0.0
        %524 = vmatpush1.msra.mxu0 0.0
        %525 = vmatprep.subr.mxu0 0.0
        %526 = vmatpush1.msra.mxu0 0.0
        %527 = vmatprep.subr.mxu0 0.0
        %528 = vmatpush1.msra.mxu0 0.0
        %529 = vmatprep.subr.mxu0 0.0
        %530 = vmatpush1.msra.mxu0 0.0
        %531 = vmatprep.subr.mxu0 0.0
        %532 = vmatpush1.msra.mxu0 0.0
        %533 = vmatprep.subr.mxu0 0.0
        %534 = vmatpush1.msra.mxu0 0.0
        %535 = vmatprep.subr.mxu0 0.0
        %536 = vmatpush1.msra.mxu0 0.0
        %537 = vmatprep.subr.mxu0 0.0
        %538 = vmatpush1.msra.mxu0 0.0
        %539 = vmatprep.subr.mxu0 0.0
        %540 = vmatpush1.msra.mxu0 0.0
        %541 = vmatprep.subr.mxu0 0.0
        %542 = vmatpush1.msra.mxu0 0.0
        %543 = vmatprep.subr.mxu0 0.0
        %544 = vmatpush1.msra.mxu0 0.0
        %545 = vmatprep.subr.mxu0 0.0
        %546 = vmatpush1.msra.mxu0 0.0
        %547 = vmatprep.subr.mxu0 0.0
        %548 = vmatpush1.msra.mxu0 0.0
        %549 = vmatprep.subr.mxu0 0.0
        %550 = vmatpush1.msra.mxu0 0.0
        %551 = vmatprep.subr.mxu0 0.0
        %552 = vmatpush1.msra.mxu0 0.0
        %553 = vmatprep.subr.mxu0 0.0
        %554 = vmatpush1.msra.mxu0 0.0
        %555 = vmatprep.subr.mxu0 0.0
        %556 = vmatpush1.msra.mxu0 0.0
        %557 = vmatprep.subr.mxu0 0.0
        %558 = vmatpush1.msra.mxu0 0.0
        %559 = vmatprep.subr.mxu0 0.0
        %560 = vmatpush1.msra.mxu0 0.0
        %561 = vmatprep.subr.mxu0 0.0
        %562 = vmatpush1.msra.mxu0 0.0
        %563 = vmatprep.subr.mxu0 0.0
        %564 = vmatpush1.msra.mxu0 0.0
        %565 = vmatprep.mubr.f32.mxu0 0.0
        %566 = vmatmul.mubr.f32.gmra.mrb[0].mxu0 %v429
        %v567 = vpop.f32.mrb[0].mxu0
        %v568 = vadd.f32 0.0, %v567
        %v569 = vpop.f32.mrb[0].mxu0
        %570 = vdwg.mxu0
        %v571 = vmul.f32 %v355, %v498
        %v572 = vmul.f32 %v425, %v568
        %v573 = vadd.f32 %v571, %v572
        %v574 = vsel %vm284, %v573, 0.0
        %v575 = vrot.slane %v574, 4
        %v576 = vadd.f32 %v574, %v575
        %v577 = vrot.slane %v576, 2
        %v578 = vadd.f32 %v576, %v577
        %v579 = vrot.slane %v578, 1
        %v580 = vadd.f32 %v578, %v579
        %v581 = vmul.f32 %v355, %v568
        %v582 = vmul.f32 %v425, %v498
        %v583 = vsub.f32 %v581, %v582
        %v584 = vsel %vm284, %v583, 0.0
        %v585 = vrot.slane %v584, 4
        %v586 = vadd.f32 %v584, %v585
        %v587 = vrot.slane %v586, 2
        %v588 = vadd.f32 %v586, %v587
        %v589 = vrot.slane %v588, 1
        %v590 = vadd.f32 %v588, %v589
        %v592 = vsel %vm284, %v580, 0
        %594 = vmatprep.subr.mxu0 0.0
        %595 = vmatpush1.msra.mxu0 %v280
        %596 = vmatprep.subr.mxu0 0.0
        %597 = vmatpush1.msra.mxu0 %v281
        %598 = vmatprep.subr.mxu0 0.0
        %599 = vmatpush1.msra.mxu0 0.0
        %600 = vmatprep.subr.mxu0 0.0
        %601 = vmatpush1.msra.mxu0 0.0
        %602 = vmatprep.subr.mxu0 0.0
        %603 = vmatpush1.msra.mxu0 0.0
        %604 = vmatprep.subr.mxu0 0.0
        %605 = vmatpush1.msra.mxu0 0.0
        %606 = vmatprep.subr.mxu0 0.0
        %607 = vmatpush1.msra.mxu0 0.0
        %608 = vmatprep.subr.mxu0 0.0
        %609 = vmatpush1.msra.mxu0 0.0
        %610 = vmatprep.subr.mxu0 0.0
        %611 = vmatpush1.msra.mxu0 0.0
        %612 = vmatprep.subr.mxu0 0.0
        %613 = vmatpush1.msra.mxu0 0.0
        %614 = vmatprep.subr.mxu0 0.0
        %615 = vmatpush1.msra.mxu0 0.0
        %616 = vmatprep.subr.mxu0 0.0
        %617 = vmatpush1.msra.mxu0 0.0
        %618 = vmatprep.subr.mxu0 0.0
        %619 = vmatpush1.msra.mxu0 0.0
        %620 = vmatprep.subr.mxu0 0.0
        %621 = vmatpush1.msra.mxu0 0.0
        %622 = vmatprep.subr.mxu0 0.0
        %623 = vmatpush1.msra.mxu0 0.0
        %624 = vmatprep.subr.mxu0 0.0
        %625 = vmatpush1.msra.mxu0 0.0
        %626 = vmatprep.subr.mxu0 0.0
        %627 = vmatpush1.msra.mxu0 0.0
        %628 = vmatprep.subr.mxu0 0.0
        %629 = vmatpush1.msra.mxu0 0.0
        %630 = vmatprep.subr.mxu0 0.0
        %631 = vmatpush1.msra.mxu0 0.0
        %632 = vmatprep.subr.mxu0 0.0
        %633 = vmatpush1.msra.mxu0 0.0
        %634 = vmatprep.subr.mxu0 0.0
        %635 = vmatpush1.msra.mxu0 0.0
        %636 = vmatprep.subr.mxu0 0.0
        %637 = vmatpush1.msra.mxu0 0.0
        %638 = vmatprep.subr.mxu0 0.0
        %639 = vmatpush1.msra.mxu0 0.0
        %640 = vmatprep.subr.mxu0 0.0
        %641 = vmatpush1.msra.mxu0 0.0
        %642 = vmatprep.subr.mxu0 0.0
        %643 = vmatpush1.msra.mxu0 0.0
        %644 = vmatprep.subr.mxu0 0.0
        %645 = vmatpush1.msra.mxu0 0.0
        %646 = vmatprep.subr.mxu0 0.0
        %647 = vmatpush1.msra.mxu0 0.0
        %648 = vmatprep.subr.mxu0 0.0
        %649 = vmatpush1.msra.mxu0 0.0
        %650 = vmatprep.subr.mxu0 0.0
        %651 = vmatpush1.msra.mxu0 0.0
        %652 = vmatprep.subr.mxu0 0.0
        %653 = vmatpush1.msra.mxu0 0.0
        %654 = vmatprep.subr.mxu0 0.0
        %655 = vmatpush1.msra.mxu0 0.0
        %656 = vmatprep.subr.mxu0 0.0
        %657 = vmatpush1.msra.mxu0 0.0
        %658 = vmatprep.mubr.f32.mxu0 0.0
        %659 = vmatmul.mubr.f32.gmra.mrb[0].mxu0 %v592
        %v660 = vpop.f32.mrb[0].mxu0
        %v661 = vadd.f32 0.0, %v660
        %v662 = vpop.f32.mrb[0].mxu0
        %663 = vdwg.mxu0
        %v665 = vsel %vm284, %v590, 0
        %667 = vmatprep.subr.mxu0 0.0
        %668 = vmatpush1.msra.mxu0 %v282
        %669 = vmatprep.subr.mxu0 0.0
        %670 = vmatpush1.msra.mxu0 %v283
        %671 = vmatprep.subr.mxu0 0.0
        %672 = vmatpush1.msra.mxu0 0.0
        %673 = vmatprep.subr.mxu0 0.0
        %674 = vmatpush1.msra.mxu0 0.0
        %675 = vmatprep.subr.mxu0 0.0
        %676 = vmatpush1.msra.mxu0 0.0
        %677 = vmatprep.subr.mxu0 0.0
        %678 = vmatpush1.msra.mxu0 0.0
        %679 = vmatprep.subr.mxu0 0.0
        %680 = vmatpush1.msra.mxu0 0.0
        %681 = vmatprep.subr.mxu0 0.0
        %682 = vmatpush1.msra.mxu0 0.0
        %683 = vmatprep.subr.mxu0 0.0
        %684 = vmatpush1.msra.mxu0 0.0
        %685 = vmatprep.subr.mxu0 0.0
        %686 = vmatpush1.msra.mxu0 0.0
        %687 = vmatprep.subr.mxu0 0.0
        %688 = vmatpush1.msra.mxu0 0.0
        %689 = vmatprep.subr.mxu0 0.0
        %690 = vmatpush1.msra.mxu0 0.0
        %691 = vmatprep.subr.mxu0 0.0
        %692 = vmatpush1.msra.mxu0 0.0
        %693 = vmatprep.subr.mxu0 0.0
        %694 = vmatpush1.msra.mxu0 0.0
        %695 = vmatprep.subr.mxu0 0.0
        %696 = vmatpush1.msra.mxu0 0.0
        %697 = vmatprep.subr.mxu0 0.0
        %698 = vmatpush1.msra.mxu0 0.0
        %699 = vmatprep.subr.mxu0 0.0
        %700 = vmatpush1.msra.mxu0 0.0
        %701 = vmatprep.subr.mxu0 0.0
        %702 = vmatpush1.msra.mxu0 0.0
        %703 = vmatprep.subr.mxu0 0.0
        %704 = vmatpush1.msra.mxu0 0.0
        %705 = vmatprep.subr.mxu0 0.0
        %706 = vmatpush1.msra.mxu0 0.0
        %707 = vmatprep.subr.mxu0 0.0
        %708 = vmatpush1.msra.mxu0 0.0
        %709 = vmatprep.subr.mxu0 0.0
        %710 = vmatpush1.msra.mxu0 0.0
        %711 = vmatprep.subr.mxu0 0.0
        %712 = vmatpush1.msra.mxu0 0.0
        %713 = vmatprep.subr.mxu0 0.0
        %714 = vmatpush1.msra.mxu0 0.0
        %715 = vmatprep.subr.mxu0 0.0
        %716 = vmatpush1.msra.mxu0 0.0
        %717 = vmatprep.subr.mxu0 0.0
        %718 = vmatpush1.msra.mxu0 0.0
        %719 = vmatprep.subr.mxu0 0.0
        %720 = vmatpush1.msra.mxu0 0.0
        %721 = vmatprep.subr.mxu0 0.0
        %722 = vmatpush1.msra.mxu0 0.0
        %723 = vmatprep.subr.mxu0 0.0
        %724 = vmatpush1.msra.mxu0 0.0
        %725 = vmatprep.subr.mxu0 0.0
        %726 = vmatpush1.msra.mxu0 0.0
        %727 = vmatprep.subr.mxu0 0.0
        %728 = vmatpush1.msra.mxu0 0.0
        %729 = vmatprep.subr.mxu0 0.0
        %730 = vmatpush1.msra.mxu0 0.0
        %731 = vmatprep.mubr.f32.mxu0 0.0
        %732 = vmatmul.mubr.f32.gmra.mrb[0].mxu0 %v665
        %v733 = vpop.f32.mrb[0].mxu0
        %v734 = vadd.f32 0.0, %v733
        %v735 = vpop.f32.mrb[0].mxu0
        %736 = vdwg.mxu0
        %v737 = vsub.f32 %v661, %v734
        %v738 = vmul.f32 %v737, 0.0078125
        %vm739 = vcmask 122880
        %740 = vst.msk [vmem:[%s277] sm:$0x1] %vm739, %v738
        %s741 = sand.u32 %s127, 1
        %s742 = scalar_lea.sflag [#allocation4], %s741
        %s743 = sand.u32 %s127, 1
        %s744 = scalar_lea.vmem [#allocation10], %s743
        // Predicated region
        $region53: #{tpu_custom_call.1} parent=35 // pred_check
          %p745 = pneg %p137
        $region54: #{tpu_custom_call.1} parent=35 // pred_check_branch
          %747 = sbr.rel (%p745) target = $region56
        $region55: #{tpu_custom_call.1} parent=35 // pred_region
          %s749 = ssub.s32 16, 16
          %750 = vsyncadd %s742, %s749
          %s751 = smul.addr %s25, 16
          %s752 = scalar_lea.hbm %s4, %s751
          %s754 = sshll.u32 %s744, 4
          %s755 = int_to_ptr.vmem [resolvable:$true] %s754
          %757 = dma.vmem_to_hbm [thread:$0]  %s755, 16, %s752, %s742
        $region56: #{tpu_custom_call.1} parent=35 // pred_fallthru
          _
      $region36: #{tpu_custom_call.1} parent=5 // pred_fallthru
        _
      %p758 = scmp.le.s32.totalorder 2, %s20
      // Predicated region
      $region57: #{tpu_custom_call.1} parent=5 // pred_check
        %p759 = pneg %p758
      $region58: #{tpu_custom_call.1} parent=5 // pred_check_branch
        %761 = sbr.rel (%p759) target = $region60
      $region59: #{tpu_custom_call.1} parent=5 // pred_region
        %s762 = ssub.s32 %s20, 2
        // Predicated region
        $region61: #{tpu_custom_call.1} parent=59 // pred_check
          %p763 = pneg %p143
        $region62: #{tpu_custom_call.1} parent=59 // pred_check_branch
          %765 = sbr.rel (%p763) target = $region64
        $region63: #{tpu_custom_call.1} parent=59 // pred_region
          %s766 = sand.u32 %s128, 1
          %s767 = scalar_lea.sflag [#allocation4], %s766
          %s768 = sand.u32 %s128, 1
          %s769 = scalar_lea.vmem [#allocation10], %s768
          %770 = dma.done %s767, 16
        $region64: #{tpu_custom_call.1} parent=59 // pred_fallthru
          _
      $region60: #{tpu_custom_call.1} parent=5 // pred_fallthru
        _
    $region6: #{tpu_custom_call.1} parent=1 // loop_footer
      %s24 = sadd.s32 1, %s20
    $region7: #{tpu_custom_call.1} parent=1 // loop_footer_branch
      %19 = sbr.rel target = $region3
    $region8: #{tpu_custom_call.1} parent=1 // loop_exit
      _
    %771 = vsyncpa [#allocation3], 1
    %s772 = scalar_lea.sflag [#allocation3], 1
    %773 = vsyncpa %s772, 1
    %774 = vsyncpa [#allocation6], 1
    %s775 = scalar_lea.sflag [#allocation6], 1
    %776 = vsyncpa %s775, 1
    %777 = vsyncpa [#allocation9], 1
    %778 = vsyncpa [#allocation4], 1
    %s779 = scalar_lea.sflag [#allocation4], 1
    %780 = vsyncpa %s779, 1

</llo_original>
